<compile_context>
chip_gen: v5e
topology: v5e:2x2
jax: 0.10.0
libtpu: 0.0.40
codegen_flags: <defaults>
</compile_context>

<pallas_src>
import functools

import jax
import jax.numpy as jnp
from jax import lax
from jax.experimental import pallas as pl
from jax.experimental.pallas import tpu as pltpu


def _kld_kernel(mu_q_ref, sigma_q_ref, mu_p_ref, sigma_p_ref, out_ref, acc_ref,
                *, valid_rows, tile_rows, need_mask):
    j = pl.program_id(1)                      # reduction step within this core

    @pl.when(j == 0)
    def _():
        acc_ref[...] = jnp.zeros_like(acc_ref)

    def _ld(ref):
        x = ref[...]
        return x if x.dtype == jnp.float32 else x.astype(jnp.float32)

    mu_q = _ld(mu_q_ref)
    sig_q = _ld(sigma_q_ref)
    mu_p = _ld(mu_p_ref)
    sig_p = _ld(sigma_p_ref)

    diff = mu_q - mu_p
    # 0.5*[sig_q - sig_p - 1 + exp(sig_p - sig_q) + diff^2 * exp(-sig_q)]
    # factored as exp(-sig_q)*(exp(sig_p) + diff^2) + (sig_q - sig_p - 1)
    term = jnp.exp(-sig_q) * (jnp.exp(sig_p) + diff * diff) + (sig_q - sig_p - 1.0)

    if need_mask:
        # logical (unclamped) row index of this block; rows >= valid_rows are
        # padding / duplicated blocks and must contribute exactly 0.
        base = (pl.program_id(0) * pl.num_programs(1) + j) * tile_rows
        row = base + lax.broadcasted_iota(jnp.int32, term.shape, 0)
        term = jnp.where(row < valid_rows, term, 0.0)

    # per-lane partial sums (cheap sublane reduce); defer the cross-lane reduce
    acc_ref[...] += jnp.sum(term, axis=0, keepdims=True)

    @pl.when(j == pl.num_programs(1) - 1)
    def _():
        out_ref[...] = 0.5 * jnp.sum(acc_ref[...], axis=1, keepdims=True)


_LANE_CANDIDATES = (2048, 1024, 512, 256, 128)
_MAX_BLOCK_BYTES = 1 << 20   # ~1 MiB per input block (4 inputs x 2 buffers = 8 MiB)


@functools.partial(jax.jit, static_argnames=("max_block_bytes",))
def kld_loss(mu_q, sigma_q, mu_p, sigma_p, *, max_block_bytes=_MAX_BLOCK_BYTES):
    """sum_b KL(p_b || q_b) for diagonal Gaussians with log-variance params."""
    assert mu_q.shape == sigma_q.shape == mu_p.shape == sigma_p.shape
    assert mu_q.ndim == 2
    B, D = mu_q.shape
    N = B * D
    itemsize = jnp.dtype(mu_q.dtype).itemsize

    # ---- choose a lane-dense 2-D view (R, C) --------------------------------
    if D % 128 == 0:
        R, C = B, D                       # already lane-dense, zero-copy
    else:
        for cand in _LANE_CANDIDATES:
            if N % cand == 0:
                R, C = N // cand, cand    # elementwise op: flatten to wide rows
                break
        else:
            R, C = B, D                   # zero-copy fallback (lane-sparse, rare)

    inputs = (mu_q, sigma_q, mu_p, sigma_p)
    if (R, C) != (B, D):
        inputs = tuple(x.reshape(R, C) for x in inputs)

    # ---- row tile: multiple of the sublane pack, ~max_block_bytes per block --
    sub = max(8, 32 // itemsize)          # 8 for f32, 16 for bf16, 32 for 8-bit
    rows_cap = max(sub, (max_block_bytes // (C * itemsize)) // sub * sub)
    if R <= rows_cap:
        TB, nblk = R, 1                   # single block == full array (exempt)
    else:
        TB, nblk = rows_cap, pl.cdiv(R, rows_cap)

    NC = 2 if nblk >= 2 else 1            # split the reduction across 2 TCs (v7x)
    spc = pl.cdiv(nblk, NC)               # row-blocks per core
    need_mask = (NC * spc * TB != R)      # ragged tail / duplicated tail block
    max_blk = nblk - 1

    def in_map(c, j):
        # clamp so an odd block count never produces an out-of-range block
        # index; duplicated blocks are zeroed by the in-kernel row mask.
        return (jnp.minimum(c * spc + j, max_blk), 0)

    in_spec = pl.BlockSpec((TB, C), in_map)

    kernel = functools.partial(_kld_kernel, valid_rows=R, tile_rows=TB,
                               need_mask=need_mask)

    partials = pl.pallas_call(
        kernel,
        out_shape=jax.ShapeDtypeStruct((NC, 1), jnp.float32),
        grid_spec=pltpu.PrefetchScalarGridSpec(
            num_scalar_prefetch=0,
            grid=(NC, spc),
            in_specs=[in_spec, in_spec, in_spec, in_spec],
            out_specs=pl.BlockSpec((1, 1), lambda c, j: (c, 0)),
            scratch_shapes=[pltpu.VMEM((1, C), jnp.float32)],
        ),
        compiler_params=pltpu.CompilerParams(
            dimension_semantics=("parallel", "arbitrary"),
            vmem_limit_bytes=32 * 1024 * 1024,
        ),
    )(*inputs)
    return jnp.sum(partials)


def _reference(mu_q, sigma_q, mu_p, sigma_p):
    mu_q, sigma_q, mu_p, sigma_p = (x.astype(jnp.float32)
                                    for x in (mu_q, sigma_q, mu_p, sigma_p))
    term = (sigma_q - sigma_p - 1.0
            + jnp.exp(sigma_p - sigma_q)
            + (mu_q - mu_p) ** 2 * jnp.exp(-sigma_q))
    return 0.5 * jnp.sum(term)


if __name__ == "__main__":
    key = jax.random.PRNGKey(0)

    def make(shape, k):
        k1, k2, k3, k4 = jax.random.split(k, 4)
        return (jax.random.normal(k1, shape, jnp.float32),
                0.5 * jax.random.normal(k2, shape, jnp.float32),
                jax.random.normal(k3, shape, jnp.float32),
                0.5 * jax.random.normal(k4, shape, jnp.float32))

    # Case 1: small shapes matching the module (batch=8, latent dim=32).
    args1 = make((8, 32), key)
    out1 = kld_loss(*args1)
    jax.block_until_ready(out1)
    ref1 = _reference(*args1)
    assert jnp.allclose(out1, ref1, rtol=1e-5, atol=1e-4), (out1, ref1)

    # Case 2: exercises the multi-block + masked-tail + 2-way parallel path
    # (tiny block budget forces several row blocks per core).
    args2 = make((50, 128), jax.random.PRNGKey(1))
    out2 = kld_loss(*args2, max_block_bytes=8 * 1024)
    jax.block_until_ready(out2)
    ref2 = _reference(*args2)
    assert jnp.allclose(out2, ref2, rtol=1e-5, atol=1e-4), (out2, ref2)

    # Case 3: odd block count -> clamped (duplicated) tail block on core 1.
    args3 = make((45, 128), jax.random.PRNGKey(2))
    out3 = kld_loss(*args3, max_block_bytes=8 * 1024)
    jax.block_until_ready(out3)
    ref3 = _reference(*args3)
    assert jnp.allclose(out3, ref3, rtol=1e-5, atol=1e-4), (out3, ref3)

    print("KERNEL_OK")
</pallas_src>

<mosaic_0001>
module attributes {stable_mosaic.version = 11 : i64} {
  func.func @_kld_kernel(%arg0: i32, %arg1: i32, %arg2: memref<1x256xf32, #tpu.memory_space<vmem>>, %arg3: memref<1x256xf32, #tpu.memory_space<vmem>>, %arg4: memref<1x256xf32, #tpu.memory_space<vmem>>, %arg5: memref<1x256xf32, #tpu.memory_space<vmem>>, %arg6: memref<1x1xf32, #tpu.memory_space<vmem>>, %arg7: memref<1x256xf32, #tpu.memory_space<vmem>>) attributes {dimension_semantics = [#tpu.dimension_semantics<parallel>, #tpu.dimension_semantics<arbitrary>], iteration_bounds = array<i64: 1, 1>, scalar_prefetch = 0 : i64, scratch_operands = 1 : i64, tpu.core_type = #tpu.core_type<tc>, window_params = [{transform_indices = @transform_0, window_bounds = array<i64: 1, 256>}, {transform_indices = @transform_1, window_bounds = array<i64: 1, 256>}, {transform_indices = @transform_2, window_bounds = array<i64: 1, 256>}, {transform_indices = @transform_3, window_bounds = array<i64: 1, 256>}, {transform_indices = @transform_4, window_bounds = array<i64: 1, 1>}]} {
    %c0_i32 = arith.constant 0 : i32
    %0 = arith.cmpi eq, %arg1, %c0_i32 : i32
    %1 = arith.extui %0 : i1 to i32
    %c0_i32_0 = arith.constant 0 : i32
    %2 = arith.cmpi ne, %1, %c0_i32_0 : i32
    scf.if %2 {
      %cst_16 = arith.constant 0.000000e+00 : f32
      %27 = vector.broadcast %cst_16 : f32 to vector<1x256xf32>
      %c0_17 = arith.constant 0 : index
      %c0_18 = arith.constant 0 : index
      %28 = vector.load %arg7[%c0_17, %c0_18] : memref<1x256xf32, #tpu.memory_space<vmem>>, vector<1x256xf32>
      tpu.vector_store %arg7[%c0_17, %c0_18], %27 {strides = array<i32>} : memref<1x256xf32, #tpu.memory_space<vmem>>, vector<1x256xf32>,
    } else {
    }
    %c0 = arith.constant 0 : index
    %c0_1 = arith.constant 0 : index
    %3 = vector.load %arg2[%c0, %c0_1] : memref<1x256xf32, #tpu.memory_space<vmem>>, vector<1x256xf32>
    %c0_2 = arith.constant 0 : index
    %c0_3 = arith.constant 0 : index
    %4 = vector.load %arg3[%c0_2, %c0_3] : memref<1x256xf32, #tpu.memory_space<vmem>>, vector<1x256xf32>
    %c0_4 = arith.constant 0 : index
    %c0_5 = arith.constant 0 : index
    %5 = vector.load %arg4[%c0_4, %c0_5] : memref<1x256xf32, #tpu.memory_space<vmem>>, vector<1x256xf32>
    %c0_6 = arith.constant 0 : index
    %c0_7 = arith.constant 0 : index
    %6 = vector.load %arg5[%c0_6, %c0_7] : memref<1x256xf32, #tpu.memory_space<vmem>>, vector<1x256xf32>
    %7 = arith.subf %3, %5 : vector<1x256xf32>
    %cst = arith.constant 0.000000e+00 : f32
    %8 = vector.broadcast %cst : f32 to vector<1x256xf32>
    %9 = arith.subf %8, %4 : vector<1x256xf32>
    %10 = math.exp %9 : vector<1x256xf32>
    %11 = math.exp %6 : vector<1x256xf32>
    %12 = arith.mulf %7, %7 : vector<1x256xf32>
    %13 = arith.addf %11, %12 : vector<1x256xf32>
    %14 = arith.mulf %10, %13 : vector<1x256xf32>
    %15 = arith.subf %4, %6 : vector<1x256xf32>
    %cst_8 = arith.constant 1.000000e+00 : f32
    %16 = vector.broadcast %cst_8 : f32 to vector<1x256xf32>
    %17 = arith.subf %15, %16 : vector<1x256xf32>
    %18 = arith.addf %14, %17 : vector<1x256xf32>
    %c0_9 = arith.constant 0 : index
    %c0_10 = arith.constant 0 : index
    %19 = vector.load %arg7[%c0_9, %c0_10] : memref<1x256xf32, #tpu.memory_space<vmem>>, vector<1x256xf32>
    %cst_11 = arith.constant dense<0.000000e+00> : vector<256xf32>
    %20 = vector.multi_reduction <add>, %18, %cst_11 [0] : vector<1x256xf32> to vector<256xf32>
    %21 = vector.shape_cast %20 : vector<256xf32> to vector<1x256xf32>
    %22 = arith.addf %19, %21 : vector<1x256xf32>
    %c0_12 = arith.constant 0 : index
    %c0_13 = arith.constant 0 : index
    %23 = vector.load %arg7[%c0_12, %c0_13] : memref<1x256xf32, #tpu.memory_space<vmem>>, vector<1x256xf32>
    tpu.vector_store %arg7[%c0_12, %c0_13], %22 {strides = array<i32>} : memref<1x256xf32, #tpu.memory_space<vmem>>, vector<1x256xf32>,
    %c0_i32_14 = arith.constant 0 : i32
    %24 = arith.cmpi eq, %arg1, %c0_i32_14 : i32
    %25 = arith.extui %24 : i1 to i32
    %c0_i32_15 = arith.constant 0 : i32
    %26 = arith.cmpi ne, %25, %c0_i32_15 : i32
    scf.if %26 {
      %c0_16 = arith.constant 0 : index
      %c0_17 = arith.constant 0 : index
      %27 = vector.load %arg7[%c0_16, %c0_17] : memref<1x256xf32, #tpu.memory_space<vmem>>, vector<1x256xf32>
      %cst_18 = arith.constant dense<0.000000e+00> : vector<1xf32>
      %28 = vector.multi_reduction <add>, %27, %cst_18 [1] : vector<1x256xf32> to vector<1xf32>
      %29 = vector.shape_cast %28 : vector<1xf32> to vector<1x1xf32>
      %cst_19 = arith.constant 5.000000e-01 : f32
      %30 = vector.broadcast %cst_19 : f32 to vector<1x1xf32>
      %31 = arith.mulf %30, %29 : vector<1x1xf32>
      %c0_20 = arith.constant 0 : index
      %c0_21 = arith.constant 0 : index
      %32 = vector.load %arg6[%c0_20, %c0_21] : memref<1x1xf32, #tpu.memory_space<vmem>>, vector<1x1xf32>
      tpu.vector_store %arg6[%c0_20, %c0_21], %31 {strides = array<i32>} : memref<1x1xf32, #tpu.memory_space<vmem>>, vector<1x1xf32>,
    } else {
    }
    return
  }
  func.func @transform_0(%arg0: i32, %arg1: i32) -> (i32, i32) {
    %c1_i32 = arith.constant 1 : i32
    %0 = arith.muli %arg0, %c1_i32 : i32
    %1 = arith.addi %0, %arg1 : i32
    %c0_i32 = arith.constant 0 : i32
    %2 = arith.minsi %1, %c0_i32 : i32
    %c0_i32_0 = arith.constant 0 : i32
    %c0_i32_1 = arith.constant 0 : i32
    return %2, %c0_i32_0 : i32, i32
  }
  func.func @transform_1(%arg0: i32, %arg1: i32) -> (i32, i32) {
    %c1_i32 = arith.constant 1 : i32
    %0 = arith.muli %arg0, %c1_i32 : i32
    %1 = arith.addi %0, %arg1 : i32
    %c0_i32 = arith.constant 0 : i32
    %2 = arith.minsi %1, %c0_i32 : i32
    %c0_i32_0 = arith.constant 0 : i32
    %c0_i32_1 = arith.constant 0 : i32
    return %2, %c0_i32_0 : i32, i32
  }
  func.func @transform_2(%arg0: i32, %arg1: i32) -> (i32, i32) {
    %c1_i32 = arith.constant 1 : i32
    %0 = arith.muli %arg0, %c1_i32 : i32
    %1 = arith.addi %0, %arg1 : i32
    %c0_i32 = arith.constant 0 : i32
    %2 = arith.minsi %1, %c0_i32 : i32
    %c0_i32_0 = arith.constant 0 : i32
    %c0_i32_1 = arith.constant 0 : i32
    return %2, %c0_i32_0 : i32, i32
  }
  func.func @transform_3(%arg0: i32, %arg1: i32) -> (i32, i32) {
    %c1_i32 = arith.constant 1 : i32
    %0 = arith.muli %arg0, %c1_i32 : i32
    %1 = arith.addi %0, %arg1 : i32
    %c0_i32 = arith.constant 0 : i32
    %2 = arith.minsi %1, %c0_i32 : i32
    %c0_i32_0 = arith.constant 0 : i32
    %c0_i32_1 = arith.constant 0 : i32
    return %2, %c0_i32_0 : i32, i32
  }
  func.func @transform_4(%arg0: i32, %arg1: i32) -> (i32, i32) {
    %c0_i32 = arith.constant 0 : i32
    %c0_i32_0 = arith.constant 0 : i32
    return %arg0, %c0_i32 : i32, i32
  }
}

</mosaic_0001>

<llo_original>
// kernel: kld_loss.1
$region0: #{kld_loss.1}
  #allocation0 [shape = 'u32[]', space=smem, size = 0x4, offset = 0x4, fixed_abs, tag = 'smem constant byte address 0x4 - core index']
  #allocation1 [shape = 'u32[72,128]{1,0:T(1,128)}', space=vmem, size = 0x9000, scoped, tag = 'internal scratch']
  #allocation2 [shape = 'f32[1,256]{1,0:T(1,128)}', space=vmem, size = 0x400, scoped, tag = 'scratch operand']
  %s0 = inlined_call_operand.vmem [shape: f32[1,256], index: 0, kind: input, shape index: {}]
  %s1 = inlined_call_operand.vmem [shape: f32[1,256], index: 1, kind: input, shape index: {}]
  %s2 = inlined_call_operand.vmem [shape: f32[1,256], index: 2, kind: input, shape index: {}]
  %s3 = inlined_call_operand.vmem [shape: f32[1,256], index: 3, kind: input, shape index: {}]
  %s4 = inlined_call_operand.hbm [shape: f32[1,1], index: 4, kind: output, shape index: {}]
  %s5 = sld [smem:[#allocation0]]
  $region34: #{kld_loss.1} parent=0
    _
  %s7 = ssub.s32 1, %s5
  %s8 = scalar_select 0, %s7, %s5
  $region1: #{kld_loss.1} parent=0
    #allocation3 [shape = 'u8[512]{0}', space=vmem, size = 0x400, scoped, tag = 'output window, operand 0, single buffered']
    #allocation4 [shape = 's32[1]{0}', space=sflag, size = 0x4, scoped, tag = 'scoped memory for kld_loss.1']
    %9 = vsyncpa [#allocation4], 0
    // Predicated region
    $region2: #{kld_loss.1} parent=1 // pred_check
      _
    $region3: #{kld_loss.1} parent=1 // pred_check_branch
      %11 = sbr.rel (0) target = $region5
    $region4: #{kld_loss.1} parent=1 // pred_region
      %s12 = sadd.s32 0, 0
      %p13 = scmp.lt.s32.totalorder %s12, 0
      %s14 = scalar_select %p13, %s12, 0
      %p15 = scmp.lt.s32.totalorder %s14, 0
      %s16 = scalar_select %p15, %s14, 0
      %s17 = smul.addr %s16, 2
      %s18 = scalar_lea.vmem %s0, %s17
      %s19 = sadd.s32 0, 0
      %p20 = scmp.lt.s32.totalorder %s19, 0
      %s21 = scalar_select %p20, %s19, 0
    $region5: #{kld_loss.1} parent=1 // pred_fallthru
      _
    // Predicated region
    $region6: #{kld_loss.1} parent=1 // pred_check
      _
    $region7: #{kld_loss.1} parent=1 // pred_check_branch
      %23 = sbr.rel (0) target = $region9
    $region8: #{kld_loss.1} parent=1 // pred_region
      %s24 = sadd.s32 0, 0
      %p25 = scmp.lt.s32.totalorder %s24, 0
      %s26 = scalar_select %p25, %s24, 0
      %p27 = scmp.lt.s32.totalorder %s26, 0
      %s28 = scalar_select %p27, %s26, 0
      %s29 = smul.addr %s28, 2
      %s30 = scalar_lea.vmem %s1, %s29
      %s31 = sadd.s32 0, 0
      %p32 = scmp.lt.s32.totalorder %s31, 0
      %s33 = scalar_select %p32, %s31, 0
    $region9: #{kld_loss.1} parent=1 // pred_fallthru
      _
    // Predicated region
    $region10: #{kld_loss.1} parent=1 // pred_check
      _
    $region11: #{kld_loss.1} parent=1 // pred_check_branch
      %35 = sbr.rel (0) target = $region13
    $region12: #{kld_loss.1} parent=1 // pred_region
      %s36 = sadd.s32 0, 0
      %p37 = scmp.lt.s32.totalorder %s36, 0
      %s38 = scalar_select %p37, %s36, 0
      %p39 = scmp.lt.s32.totalorder %s38, 0
      %s40 = scalar_select %p39, %s38, 0
      %s41 = smul.addr %s40, 2
      %s42 = scalar_lea.vmem %s2, %s41
      %s43 = sadd.s32 0, 0
      %p44 = scmp.lt.s32.totalorder %s43, 0
      %s45 = scalar_select %p44, %s43, 0
    $region13: #{kld_loss.1} parent=1 // pred_fallthru
      _
    // Predicated region
    $region14: #{kld_loss.1} parent=1 // pred_check
      _
    $region15: #{kld_loss.1} parent=1 // pred_check_branch
      %47 = sbr.rel (0) target = $region17
    $region16: #{kld_loss.1} parent=1 // pred_region
      %s48 = sadd.s32 0, 0
      %p49 = scmp.lt.s32.totalorder %s48, 0
      %s50 = scalar_select %p49, %s48, 0
      %p51 = scmp.lt.s32.totalorder %s50, 0
      %s52 = scalar_select %p51, %s50, 0
      %s53 = smul.addr %s52, 2
      %s54 = scalar_lea.vmem %s3, %s53
      %s55 = sadd.s32 0, 0
      %p56 = scmp.lt.s32.totalorder %s55, 0
      %s57 = scalar_select %p56, %s55, 0
    $region17: #{kld_loss.1} parent=1 // pred_fallthru
      _
    %s58 = sadd.s32 0, 0
    %p59 = scmp.lt.s32.totalorder %s58, 0
    %s60 = scalar_select %p59, %s58, 0
    %p61 = scmp.lt.s32.totalorder %s60, 0
    %s62 = scalar_select %p61, %s60, 0
    %s63 = smul.addr %s62, 2
    %s64 = scalar_lea.vmem %s0, %s63
    %s65 = sadd.s32 0, 0
    %p66 = scmp.lt.s32.totalorder %s65, 0
    %s67 = scalar_select %p66, %s65, 0
    %p68 = scmp.lt.s32.totalorder %s67, 0
    %s69 = scalar_select %p68, %s67, 0
    %s70 = smul.addr %s69, 2
    %s71 = scalar_lea.vmem %s1, %s70
    %s72 = sadd.s32 0, 0
    %p73 = scmp.lt.s32.totalorder %s72, 0
    %s74 = scalar_select %p73, %s72, 0
    %p75 = scmp.lt.s32.totalorder %s74, 0
    %s76 = scalar_select %p75, %s74, 0
    %s77 = smul.addr %s76, 2
    %s78 = scalar_lea.vmem %s2, %s77
    %s79 = sadd.s32 0, 0
    %p80 = scmp.lt.s32.totalorder %s79, 0
    %s81 = scalar_select %p80, %s79, 0
    %p82 = scmp.lt.s32.totalorder %s81, 0
    %s83 = scalar_select %p82, %s81, 0
    %s84 = smul.addr %s83, 2
    %s85 = scalar_lea.vmem %s3, %s84
    %s86 = sadd.s32 0, 0
    %p87 = scmp.lt.s32.totalorder %s86, 0
    %s88 = scalar_select %p87, %s86, 0
    %p89 = scmp.lt.s32.totalorder %s88, 0
    %s90 = scalar_select %p89, %s88, 0
    %s91 = smul.addr %s90, 2
    %s92 = scalar_lea.vmem %s0, %s91
    %s93 = sadd.s32 0, 0
    %p94 = scmp.lt.s32.totalorder %s93, 0
    %s95 = scalar_select %p94, %s93, 0
    %s96 = sadd.s32 0, 0
    %p97 = scmp.lt.s32.totalorder %s96, 0
    %s98 = scalar_select %p97, %s96, 0
    %p99 = scmp.lt.s32.totalorder %s98, 0
    %s100 = scalar_select %p99, %s98, 0
    %s101 = smul.addr %s100, 2
    %s102 = scalar_lea.vmem %s1, %s101
    %s103 = sadd.s32 0, 0
    %p104 = scmp.lt.s32.totalorder %s103, 0
    %s105 = scalar_select %p104, %s103, 0
    %s106 = sadd.s32 0, 0
    %p107 = scmp.lt.s32.totalorder %s106, 0
    %s108 = scalar_select %p107, %s106, 0
    %p109 = scmp.lt.s32.totalorder %s108, 0
    %s110 = scalar_select %p109, %s108, 0
    %s111 = smul.addr %s110, 2
    %s112 = scalar_lea.vmem %s2, %s111
    %s113 = sadd.s32 0, 0
    %p114 = scmp.lt.s32.totalorder %s113, 0
    %s115 = scalar_select %p114, %s113, 0
    %s116 = sadd.s32 0, 0
    %p117 = scmp.lt.s32.totalorder %s116, 0
    %s118 = scalar_select %p117, %s116, 0
    %p119 = scmp.lt.s32.totalorder %s118, 0
    %s120 = scalar_select %p119, %s118, 0
    %s121 = smul.addr %s120, 2
    %s122 = scalar_lea.vmem %s3, %s121
    %s123 = sadd.s32 0, 0
    %p124 = scmp.lt.s32.totalorder %s123, 0
    %s125 = scalar_select %p124, %s123, 0
    %p126 = scmp.eq.s32.totalorder 0, 0
    // Predicated region
    $region18: #{kld_loss.1} parent=1 // pred_check
      %p127 = pneg %p126
    $region19: #{kld_loss.1} parent=1 // pred_check_branch
      %129 = sbr.rel (%p127) target = $region21
    $region20: #{kld_loss.1} parent=1 // pred_region
      %v130 = vlaneseq
      %vm131 = vcmp.ge.s32.totalorder %v130, 0
      %vm132 = vcmp.lt.s32.totalorder %v130, 256
      %vm133 = vmand %vm131, %vm132
      %134 = vst.msk [vmem:[#allocation2] sm:$0x3] %vm133, 0.0
    $region21: #{kld_loss.1} parent=1 // pred_fallthru
      _
    %v135 = vld [vmem:[%s92] sm:$0x3]
    %v136 = vld [vmem:[%s102] sm:$0x3]
    %v137 = vld [vmem:[%s112] sm:$0x3]
    %v138 = vld [vmem:[%s122] sm:$0x3]
    %v139 = vsub.f32 %v135, %v137
    %v140 = vsub.f32 0.0, %v136
    %v141 = vmul.f32 %v140, 1.442695
    %v142 = vpow.pop %v141
    %v143 = vmul.f32 %v138, 1.442695
    %v144 = vpow.pop %v143
    %v145 = vmul.f32 %v139, %v139
    %v146 = vadd.f32 %v144, %v145
    %v147 = vmul.f32 %v142, %v146
    %v148 = vsub.f32 %v136, %v138
    %v149 = vsub.f32 %v148, 1.0
    %v150 = vadd.f32 %v147, %v149
    %v151 = vld [vmem:[#allocation2] sm:$0x3]
    %v152 = vadd.f32 %v150, 0.0
    %v153 = vadd.f32 %v151, %v152
    %v154 = vlaneseq
    %vm155 = vcmp.ge.s32.totalorder %v154, 0
    %vm156 = vcmp.lt.s32.totalorder %v154, 256
    %vm157 = vmand %vm155, %vm156
    %158 = vst.msk [vmem:[#allocation2] sm:$0x3] %vm157, %v153
    // Predicated region
    $region22: #{kld_loss.1} parent=1 // pred_check
      %p159 = pneg %p126
    $region23: #{kld_loss.1} parent=1 // pred_check_branch
      %161 = sbr.rel (%p159) target = $region25
    $region24: #{kld_loss.1} parent=1 // pred_region
      %v162 = vld [vmem:[#allocation2] sm:$0x3]
      %v164 = vperm.slane %v162, 0
      %v165 = vperm.slane %v162, 1
      %vm168 = vcmask 1040384
      %v169 = vsel %vm168, %v164, 0.0
      %v170 = vsel %vm168, %v165, 0.0
      %v171 = vadd.f32 %v169, %v170
      %172 = vadd.xlane.f32.xlu0 %v171
      %v173 = vpop.xlane.xlu0 %172
      %v174 = vmul.f32 %v173, 0.5
      %vm175 = vcmask 0
      %176 = vst.msk [vmem:[#allocation3] sm:$0x1] %vm175, %v174
    $region25: #{kld_loss.1} parent=1 // pred_fallthru
      _
    // Predicated region
    $region26: #{kld_loss.1} parent=1 // pred_check
      _
    $region27: #{kld_loss.1} parent=1 // pred_check_branch
      %178 = sbr.rel (0) target = $region29
    $region28: #{kld_loss.1} parent=1 // pred_region
      %180 = vsyncadd [#allocation4], 0
      %s182 = sshll.u32 [#allocation3], 4
      %s183 = int_to_ptr.vmem [resolvable:$true] %s182
      %s184 = sshll.u32 %s4, 4
      %s185 = int_to_ptr.hbm [resolvable:$true] %s184
      %187 = dma.vmem_to_hbm [thread:$0]  %s183, 16, %s185, [#allocation4]
    $region29: #{kld_loss.1} parent=1 // pred_fallthru
      _
    // Predicated region
    $region30: #{kld_loss.1} parent=1 // pred_check
      _
    $region31: #{kld_loss.1} parent=1 // pred_check_branch
      %189 = sbr.rel (0) target = $region33
    $region32: #{kld_loss.1} parent=1 // pred_region
      %191 = dma.done [#allocation4], 16
    $region33: #{kld_loss.1} parent=1 // pred_fallthru
      _
    %192 = vsyncpa [#allocation4], 1

</llo_original>
